<compile_context>
chip_gen: v7x
topology: tpu7x:2x2x1
jax: 0.10.0
libtpu: 0.0.40
codegen_flags: <defaults>
</compile_context>

<pallas_src>
import math
import functools

import jax
import jax.numpy as jnp
from jax.experimental import pallas as pl
from jax.experimental.pallas import tpu as pltpu

_LANE = 128
# Conservative VMEM budget for tile sizing: fits v7x's 64 MiB physical VMEM
# and is explicitly requested via vmem_limit_bytes (overrides v5e's 16 MiB
# scoped default).
_VMEM_BUDGET = 48 * 1024 * 1024
_VMEM_FLOOR = 16 * 1024 * 1024
_VMEM_CAP = 64 * 1024 * 1024


def _round_up(x, m):
    return ((x + m - 1) // m) * m


def _sublane_multiple(dtype):
    size = jnp.dtype(dtype).itemsize
    if size >= 4:
        return 8
    if size == 2:
        return 16
    return 32


def _linear_kernel(x_ref, w_ref, b_ref, o_ref):
    # One batch tile: (tm, ft_in) @ (ft_in, n_pad) -> f32 acc, + bias, cast.
    # In-kernel cast is a no-op for f32; for bf16 weights it is a VPU cast on
    # VMEM-resident data (hidden under the x DMA), keeping single-pass MXU.
    x = x_ref[...].astype(w_ref.dtype)
    acc = jnp.dot(x, w_ref[...], preferred_element_type=jnp.float32)
    o_ref[...] = (acc + b_ref[...]).astype(o_ref.dtype)


def prepare_logreg_params(weight, bias, compute_dtype=None):
    """One-time parameter prep — call at init and cache the result.

    weight: (nb_classes, ft_in)  PyTorch nn.Linear convention
    bias:   (nb_classes,)
    Returns (w_t, b_pad) with the class dim padded to a multiple of 128 lanes:
      w_t:   (ft_in, n_pad)  in compute_dtype (or weight.dtype)
      b_pad: (1, n_pad)      float32
    """
    nb_classes, ft_in = weight.shape
    n_pad = _round_up(max(nb_classes, _LANE), _LANE)
    dt = weight.dtype if compute_dtype is None else compute_dtype
    w_t = jnp.zeros((ft_in, n_pad), dt).at[:, :nb_classes].set(weight.T.astype(dt))
    b_pad = jnp.zeros((1, n_pad), jnp.float32).at[:, :nb_classes].set(
        bias.astype(jnp.float32))
    return w_t, b_pad


def _pick_tile_and_vmem(batch, ft_in, n_pad, x_size, w_size, out_size, block_m, sub):
    # Resident weight + bias (assume double-buffered worst case).
    fixed = 2 * ft_in * n_pad * w_size + 2 * n_pad * 4
    # Per batch row: double-buffered x tile + double-buffered output tile.
    per_row = 2 * ft_in * x_size + 2 * n_pad * max(out_size, 4)
    avail = max(_VMEM_BUDGET - fixed, sub * per_row)
    tm_cap = max(sub, (avail // per_row // sub) * sub)

    tm = min(block_m, _round_up(batch, sub), tm_cap)
    tm = max(sub, (tm // sub) * sub)
    # Keep >=2 grid steps when the batch allows it, so v7x's two TensorCores
    # both get work from the "parallel" batch axis.
    if batch >= 2 * sub and pl.cdiv(batch, tm) < 2:
        tm = _round_up(pl.cdiv(batch, 2), sub)

    vmem_bytes = fixed + tm * per_row + (2 << 20)  # +2 MiB headroom
    vmem_bytes = min(max(vmem_bytes, _VMEM_FLOOR), _VMEM_CAP)
    return tm, vmem_bytes


@functools.partial(jax.jit, static_argnames=("nb_classes", "block_m"))
def _logreg_matmul(seq, w_t, b_pad, *, nb_classes, block_m):
    batch, ft_in = seq.shape
    n_pad = w_t.shape[1]
    x_size = jnp.dtype(seq.dtype).itemsize
    w_size = jnp.dtype(w_t.dtype).itemsize
    out_size = x_size
    sub = _sublane_multiple(seq.dtype)

    tm, vmem_bytes = _pick_tile_and_vmem(
        batch, ft_in, n_pad, x_size, w_size, out_size, block_m, sub)
    grid_m = pl.cdiv(batch, tm)

    out = pl.pallas_call(
        _linear_kernel,
        out_shape=jax.ShapeDtypeStruct((batch, n_pad), seq.dtype),
        grid_spec=pltpu.PrefetchScalarGridSpec(
            num_scalar_prefetch=0,
            grid=(grid_m,),
            in_specs=[
                # batch tile: pipelined (double-buffered) across grid steps;
                # partial edge block is masked by Pallas (no jnp.pad of x).
                pl.BlockSpec((tm, ft_in), lambda i: (i, 0)),
                # weight: resident across all grid steps
                pl.BlockSpec((ft_in, n_pad), lambda i: (0, 0)),
                # bias: resident across all grid steps
                pl.BlockSpec((1, n_pad), lambda i: (0, 0)),
            ],
            out_specs=pl.BlockSpec((tm, n_pad), lambda i: (i, 0)),
        ),
        compiler_params=pltpu.CompilerParams(
            dimension_semantics=("parallel",),
            vmem_limit_bytes=vmem_bytes,
        ),
        cost_estimate=pl.CostEstimate(
            flops=2 * batch * ft_in * n_pad,
            transcendentals=0,
            bytes_accessed=(batch * ft_in * x_size
                            + ft_in * n_pad * w_size
                            + n_pad * 4
                            + batch * n_pad * out_size),
        ),
    )(seq, w_t, b_pad)

    # Only the lane padding of the class dim needs stripping (batch is exact).
    # TODO(synk): skip this slice if the consumer can mask columns >= nb_classes.
    if n_pad != nb_classes:
        out = out[:, :nb_classes]
    return out


def init_logreg_params(key, ft_in, nb_classes):
    """Deterministic init matching LogReg.__init__:
       xavier_uniform_ on weight, zeros on bias."""
    a = math.sqrt(6.0 / (ft_in + nb_classes))
    weight = jax.random.uniform(
        key, (nb_classes, ft_in), dtype=jnp.float32, minval=-a, maxval=a)
    bias = jnp.zeros((nb_classes,), dtype=jnp.float32)
    return weight, bias


class LogRegPallas:
    """Pallas equivalent of LogReg: params prepared ONCE at init, not per call."""

    def __init__(self, ft_in, nb_classes, key, compute_dtype=None):
        self.ft_in = ft_in
        self.nb_classes = nb_classes
        self.weight, self.bias = init_logreg_params(key, ft_in, nb_classes)
        self.w_t, self.b_pad = prepare_logreg_params(
            self.weight, self.bias, compute_dtype)

    def __call__(self, seq, block_m=1024):
        return _logreg_matmul(seq, self.w_t, self.b_pad,
                              nb_classes=self.nb_classes, block_m=block_m)


def logreg_forward(seq, weight, bias, *, block_m=1024, compute_dtype=None):
    """Convenience one-shot wrapper (prefer LogRegPallas for repeated calls)."""
    w_t, b_pad = prepare_logreg_params(weight, bias, compute_dtype)
    return _logreg_matmul(seq, w_t, b_pad,
                          nb_classes=weight.shape[0], block_m=block_m)


if __name__ == "__main__":
    # NOTE: at these toy sizes a plain jnp.dot beats any Pallas kernel
    # (per-step overhead ~0.35 us); these shapes are for correctness only.
    key = jax.random.PRNGKey(0)
    k_x, k_w, k_x2 = jax.random.split(key, 3)

    ft_in, nb_classes = 32, 16
    model = LogRegPallas(ft_in, nb_classes, k_w)            # f32 params, cached
    model_bf16 = LogRegPallas.__new__(LogRegPallas)          # same weights, bf16 compute
    model_bf16.ft_in, model_bf16.nb_classes = ft_in, nb_classes
    model_bf16.weight, model_bf16.bias = model.weight, model.bias
    model_bf16.w_t, model_bf16.b_pad = prepare_logreg_params(
        model.weight, model.bias, compute_dtype=jnp.bfloat16)

    # 1) f32 path, batch divides the tile.
    batch = 8
    seq = jax.random.normal(k_x, (batch, ft_in), dtype=jnp.float32)
    out = jax.block_until_ready(model(seq))
    ref = seq @ model.weight.T + model.bias
    assert out.shape == (batch, nb_classes)
    assert jnp.allclose(out, ref, atol=1e-5, rtol=1e-5)

    # 2) f32 path, batch that does NOT divide the tile (masked edge block, 2 grid steps).
    batch2 = 20
    seq2 = jax.random.normal(k_x2, (batch2, ft_in), dtype=jnp.float32)
    out2 = jax.block_until_ready(model(seq2))
    ref2 = seq2 @ model.weight.T + model.bias
    assert out2.shape == (batch2, nb_classes)
    assert jnp.allclose(out2, ref2, atol=1e-5, rtol=1e-5)

    # 3) bf16-weight path (in-kernel cast of f32 activations, f32 accumulate).
    out3 = jax.block_until_ready(model_bf16(seq2))
    assert out3.shape == (batch2, nb_classes)
    assert jnp.allclose(out3, ref2, atol=5e-2, rtol=5e-2)

    print("KERNEL_OK")
</pallas_src>

<mosaic_0001>
module attributes {stable_mosaic.version = 11 : i64} {
  func.func @_linear_kernel(%arg0: i32, %arg1: memref<8x32xf32, #tpu.memory_space<vmem>>, %arg2: memref<32x128xf32, #tpu.memory_space<vmem>>, %arg3: memref<1x128xf32, #tpu.memory_space<vmem>>, %arg4: memref<8x128xf32, #tpu.memory_space<vmem>>) attributes {dimension_semantics = [#tpu.dimension_semantics<parallel>], iteration_bounds = array<i64: 1>, scalar_prefetch = 0 : i64, scratch_operands = 0 : i64, tpu.core_type = #tpu.core_type<tc>, window_params = [{transform_indices = @transform_0, window_bounds = array<i64: 8, 32>}, {pipeline_mode = #tpu.pipeline_mode<synchronous>, transform_indices = @transform_1, window_bounds = array<i64: 32, 128>}, {pipeline_mode = #tpu.pipeline_mode<synchronous>, transform_indices = @transform_2, window_bounds = array<i64: 1, 128>}, {transform_indices = @transform_3, window_bounds = array<i64: 8, 128>}]} {
    %c0 = arith.constant 0 : index
    %c0_0 = arith.constant 0 : index
    %0 = vector.load %arg1[%c0, %c0_0] : memref<8x32xf32, #tpu.memory_space<vmem>>, vector<8x32xf32>
    %c0_1 = arith.constant 0 : index
    %c0_2 = arith.constant 0 : index
    %1 = vector.load %arg2[%c0_1, %c0_2] : memref<32x128xf32, #tpu.memory_space<vmem>>, vector<32x128xf32>
    %cst = arith.constant dense<0.000000e+00> : vector<8x128xf32>
    %2 = tpu.matmul %0, %1, %cst {dimension_numbers = #tpu.dot_dimension_numbers<[1], [0], [0], [1], [0, 0, 1, 1], [], []>} : vector<8x32xf32>, vector<32x128xf32>, vector<8x128xf32> -> vector<8x128xf32>
    %c0_3 = arith.constant 0 : index
    %c0_4 = arith.constant 0 : index
    %3 = vector.load %arg3[%c0_3, %c0_4] : memref<1x128xf32, #tpu.memory_space<vmem>>, vector<1x128xf32>
    %4 = vector.broadcast %3 : vector<1x128xf32> to vector<8x128xf32>
    %5 = arith.addf %2, %4 : vector<8x128xf32>
    %c0_5 = arith.constant 0 : index
    %c0_6 = arith.constant 0 : index
    %6 = vector.load %arg4[%c0_5, %c0_6] : memref<8x128xf32, #tpu.memory_space<vmem>>, vector<8x128xf32>
    tpu.vector_store %arg4[%c0_5, %c0_6], %5 {strides = array<i32>} : memref<8x128xf32, #tpu.memory_space<vmem>>, vector<8x128xf32>,
    return
  }
  func.func @transform_0(%arg0: i32) -> (i32, i32) {
    %c0_i32 = arith.constant 0 : i32
    %c0_i32_0 = arith.constant 0 : i32
    return %arg0, %c0_i32 : i32, i32
  }
  func.func @transform_1(%arg0: i32) -> (i32, i32) {
    %c0_i32 = arith.constant 0 : i32
    %c0_i32_0 = arith.constant 0 : i32
    %c0_i32_1 = arith.constant 0 : i32
    return %c0_i32, %c0_i32_0 : i32, i32
  }
  func.func @transform_2(%arg0: i32) -> (i32, i32) {
    %c0_i32 = arith.constant 0 : i32
    %c0_i32_0 = arith.constant 0 : i32
    %c0_i32_1 = arith.constant 0 : i32
    return %c0_i32, %c0_i32_0 : i32, i32
  }
  func.func @transform_3(%arg0: i32) -> (i32, i32) {
    %c0_i32 = arith.constant 0 : i32
    %c0_i32_0 = arith.constant 0 : i32
    return %arg0, %c0_i32 : i32, i32
  }
}

</mosaic_0001>

<llo_original>
// kernel: _logreg_matmul.1
$region0: #{_logreg_matmul.1}
  #allocation0 [shape = 'u32[]', space=smem, size = 0x4, offset = 0x4, fixed_abs, tag = 'smem constant byte address 0x4 - core index']
  #allocation1 [shape = 'u32[144,128]{1,0:T(1,128)}', space=vmem, size = 0x12000, scoped, tag = 'internal scratch']
  %s0 = inlined_call_operand.hbm [shape: f32[8,32], index: 0, kind: input, shape index: {}]
  %s1 = inlined_call_operand.hbm [shape: f32[32,128], index: 1, kind: input, shape index: {}]
  %s2 = inlined_call_operand.vmem [shape: f32[1,128], index: 2, kind: input, shape index: {}]
  %s3 = inlined_call_operand.hbm [shape: f32[8,128], index: 3, kind: output, shape index: {}]
  %s4 = sld [smem:[#allocation0]]
  $region30: #{_logreg_matmul.1} parent=0
    _
  %s6 = ssub.s32 1, %s4
  %s7 = scalar_select 0, %s6, %s4
  $region1: #{_logreg_matmul.1} parent=0
    #allocation2 [shape = 'u8[4096]{0}', space=vmem, size = 0x1000, scoped, tag = 'input window, operand 0, single buffered']
    #allocation3 [shape = 's32[1]{0}', space=sflag, size = 0x4, scoped, tag = 'scoped memory for _logreg_matmul.1']
    #allocation4 [shape = 's32[1]{0}', space=sflag, size = 0x4, scoped, tag = 'scoped memory for _logreg_matmul.1']
    #allocation5 [shape = 'u8[16384]{0}', space=vmem, size = 0x4000, scoped, tag = 'input window, operand 1, single buffered']
    #allocation6 [shape = 's32[1]{0}', space=sflag, size = 0x4, scoped, tag = 'scoped memory for _logreg_matmul.1']
    #allocation7 [shape = 'u8[4096]{0}', space=vmem, size = 0x1000, scoped, tag = 'output window, operand 0, single buffered']
    %8 = vsyncpa [#allocation3], 0
    %9 = vsyncpa [#allocation6], 0
    %10 = vsyncpa [#allocation4], 0
    // Predicated region
    $region2: #{_logreg_matmul.1} parent=1 // pred_check
      _
    $region3: #{_logreg_matmul.1} parent=1 // pred_check_branch
      %12 = sbr.rel (0) target = $region5
    $region4: #{_logreg_matmul.1} parent=1 // pred_region
      %s14 = ssub.s32 128, 128
      %15 = vsyncadd [#allocation3], %s14
      %s17 = sshll.u32 [#allocation2], 4
      %s18 = int_to_ptr.vmem [resolvable:$true] %s17
      %20 = dma.hbm_to_vmem [thread:$0]  %s0, 128, %s18, [#allocation3]
    $region5: #{_logreg_matmul.1} parent=1 // pred_fallthru
      _
    // Predicated region
    $region6: #{_logreg_matmul.1} parent=1 // pred_check
      _
    $region7: #{_logreg_matmul.1} parent=1 // pred_check_branch
      %22 = sbr.rel (0) target = $region9
    $region8: #{_logreg_matmul.1} parent=1 // pred_region
      %s24 = ssub.s32 512, 512
      %25 = vsyncadd [#allocation6], %s24
      %s26 = sshll.u32 [#allocation5], 4
      %s27 = int_to_ptr.vmem [resolvable:$true] %s26
      %32 = dma.hbm_to_vmem [thread:$0]  %s1, 512, %s27, [#allocation6], 128, 128, 8
    $region9: #{_logreg_matmul.1} parent=1 // pred_fallthru
      _
    // Predicated region
    $region10: #{_logreg_matmul.1} parent=1 // pred_check
      _
    $region11: #{_logreg_matmul.1} parent=1 // pred_check_branch
      %34 = sbr.rel (0) target = $region13
    $region12: #{_logreg_matmul.1} parent=1 // pred_region
      _
    $region13: #{_logreg_matmul.1} parent=1 // pred_fallthru
      _
    // Predicated region
    $region14: #{_logreg_matmul.1} parent=1 // pred_check
      _
    $region15: #{_logreg_matmul.1} parent=1 // pred_check_branch
      %36 = sbr.rel (0) target = $region17
    $region16: #{_logreg_matmul.1} parent=1 // pred_region
      %37 = dma.done [#allocation3], 128
    $region17: #{_logreg_matmul.1} parent=1 // pred_fallthru
      _
    // Predicated region
    $region18: #{_logreg_matmul.1} parent=1 // pred_check
      _
    $region19: #{_logreg_matmul.1} parent=1 // pred_check_branch
      %39 = sbr.rel (0) target = $region21
    $region20: #{_logreg_matmul.1} parent=1 // pred_region
      %40 = dma.done [#allocation6], 512
    $region21: #{_logreg_matmul.1} parent=1 // pred_fallthru
      _
    %v41 = vld [vmem:[#allocation2] sm:$0xff]
    %v42 = vld [vmem:[#allocation5] sm:$0xff]
    %v43 = vld [vmem:[#allocation5 + $0x8] sm:$0xff]
    %v44 = vld [vmem:[#allocation5 + $0x10] sm:$0xff]
    %v45 = vld [vmem:[#allocation5 + $0x18] sm:$0xff]
    %v46 = vld [vmem:[%s2] sm:$0x1]
    %v48 = vlaneseq
    %v49 = vshrl.u32 %v48, 7
    %v50 = vsub.s32 0, %v49
    %v51 = vrot.slane %v46, %v50
    %vm53 = vcmask 261120
    %v55 = vsel %vm53, %v41, 0
    %57 = vmatprep.subr.mxu0 0.0
    %58 = vmatpush1.msra.mxu0 %v42
    %59 = vmatprep.subr.mxu0 0.0
    %60 = vmatpush1.msra.mxu0 %v43
    %61 = vmatprep.subr.mxu0 0.0
    %62 = vmatpush1.msra.mxu0 %v44
    %63 = vmatprep.subr.mxu0 0.0
    %64 = vmatpush1.msra.mxu0 %v45
    %65 = vmatprep.subr.mxu0 0.0
    %66 = vmatpush1.msra.mxu0 0.0
    %67 = vmatprep.subr.mxu0 0.0
    %68 = vmatpush1.msra.mxu0 0.0
    %69 = vmatprep.subr.mxu0 0.0
    %70 = vmatpush1.msra.mxu0 0.0
    %71 = vmatprep.subr.mxu0 0.0
    %72 = vmatpush1.msra.mxu0 0.0
    %73 = vmatprep.subr.mxu0 0.0
    %74 = vmatpush1.msra.mxu0 0.0
    %75 = vmatprep.subr.mxu0 0.0
    %76 = vmatpush1.msra.mxu0 0.0
    %77 = vmatprep.subr.mxu0 0.0
    %78 = vmatpush1.msra.mxu0 0.0
    %79 = vmatprep.subr.mxu0 0.0
    %80 = vmatpush1.msra.mxu0 0.0
    %81 = vmatprep.subr.mxu0 0.0
    %82 = vmatpush1.msra.mxu0 0.0
    %83 = vmatprep.subr.mxu0 0.0
    %84 = vmatpush1.msra.mxu0 0.0
    %85 = vmatprep.subr.mxu0 0.0
    %86 = vmatpush1.msra.mxu0 0.0
    %87 = vmatprep.subr.mxu0 0.0
    %88 = vmatpush1.msra.mxu0 0.0
    %89 = vmatprep.subr.mxu0 0.0
    %90 = vmatpush1.msra.mxu0 0.0
    %91 = vmatprep.subr.mxu0 0.0
    %92 = vmatpush1.msra.mxu0 0.0
    %93 = vmatprep.subr.mxu0 0.0
    %94 = vmatpush1.msra.mxu0 0.0
    %95 = vmatprep.subr.mxu0 0.0
    %96 = vmatpush1.msra.mxu0 0.0
    %97 = vmatprep.subr.mxu0 0.0
    %98 = vmatpush1.msra.mxu0 0.0
    %99 = vmatprep.subr.mxu0 0.0
    %100 = vmatpush1.msra.mxu0 0.0
    %101 = vmatprep.subr.mxu0 0.0
    %102 = vmatpush1.msra.mxu0 0.0
    %103 = vmatprep.subr.mxu0 0.0
    %104 = vmatpush1.msra.mxu0 0.0
    %105 = vmatprep.subr.mxu0 0.0
    %106 = vmatpush1.msra.mxu0 0.0
    %107 = vmatprep.subr.mxu0 0.0
    %108 = vmatpush1.msra.mxu0 0.0
    %109 = vmatprep.subr.mxu0 0.0
    %110 = vmatpush1.msra.mxu0 0.0
    %111 = vmatprep.subr.mxu0 0.0
    %112 = vmatpush1.msra.mxu0 0.0
    %113 = vmatprep.subr.mxu0 0.0
    %114 = vmatpush1.msra.mxu0 0.0
    %115 = vmatprep.subr.mxu0 0.0
    %116 = vmatpush1.msra.mxu0 0.0
    %117 = vmatprep.subr.mxu0 0.0
    %118 = vmatpush1.msra.mxu0 0.0
    %119 = vmatprep.subr.mxu0 0.0
    %120 = vmatpush1.msra.mxu0 0.0
    %121 = vmatprep.mubr.f32.mxu0 0.0
    %122 = vmatmul.mubr.f32.gmra.mrb[0].mxu0 %v55
    %v123 = vpop.f32.mrb[0].mxu0
    %v124 = vadd.f32 %v51, %v123
    %v125 = vpop.f32.mrb[0].mxu0
    %126 = vdwg.mxu0
    %127 = vst [vmem:[#allocation7] sm:$0xff] %v124
    // Predicated region
    $region22: #{_logreg_matmul.1} parent=1 // pred_check
      _
    $region23: #{_logreg_matmul.1} parent=1 // pred_check_branch
      %129 = sbr.rel (0) target = $region25
    $region24: #{_logreg_matmul.1} parent=1 // pred_region
      %s131 = ssub.s32 128, 128
      %132 = vsyncadd [#allocation4], %s131
      %s134 = sshll.u32 [#allocation7], 4
      %s135 = int_to_ptr.vmem [resolvable:$true] %s134
      %137 = dma.vmem_to_hbm [thread:$0]  %s135, 128, %s3, [#allocation4]
    $region25: #{_logreg_matmul.1} parent=1 // pred_fallthru
      _
    // Predicated region
    $region26: #{_logreg_matmul.1} parent=1 // pred_check
      _
    $region27: #{_logreg_matmul.1} parent=1 // pred_check_branch
      %139 = sbr.rel (0) target = $region29
    $region28: #{_logreg_matmul.1} parent=1 // pred_region
      %140 = dma.done [#allocation4], 128
    $region29: #{_logreg_matmul.1} parent=1 // pred_fallthru
      _
    %141 = vsyncpa [#allocation3], 1
    %142 = vsyncpa [#allocation6], 1
    %143 = vsyncpa [#allocation4], 1

</llo_original>
